<compile_context>
chip_gen: v5e
topology: v5e:2x2
jax: 0.10.0
libtpu: 0.0.40
codegen_flags: <defaults>
</compile_context>

<pallas_src>
import jax
import jax.numpy as jnp
from jax.experimental import pallas as pl
from jax.experimental.pallas import tpu as pltpu


def _add_pos_kernel(x_ref, e_ref, o_ref):
    # x_ref: (TB, TR, C) batch/row tile; e_ref: (TR, C) shared embedding tile.
    # The add promotes (embed stays f32); cast to the output dtype in-kernel.
    o_ref[...] = (x_ref[...] + e_ref[...][None]).astype(o_ref.dtype)


def _vmem_plan():
    """Generation-aware (vmem_limit_bytes, per-buffer tile target bytes)."""
    phys = None
    try:
        info = pltpu.get_tpu_info()
        for attr in ("vmem_capacity_bytes", "vmem_size_bytes", "vmem_bytes"):
            val = getattr(info, attr, None)
            if val:
                phys = int(val)
                break
    except Exception:
        phys = None
    if not phys:
        phys = 64 << 20                 # conservative floor: v7x has 64 MiB/TC
    # Leave >= 25% of physical VMEM as headroom for Mosaic internals.
    limit = min((phys * 3) // 4, 64 << 20)
    # 3 streams (x, embed, out) x 2 pipeline buffers ~= 6 tile-sized buffers;
    # keep their sum at <= half the scoped limit (24 MiB at 4 MiB tiles).
    target = max(1 << 20, min(1 << 22, limit // 12))
    return limit, target


def _flatten_layout(L, D):
    """Pick a lane-dense per-batch 2D layout (M, C) with M*C == L*D."""
    N = L * D
    if D % 128 == 0:
        return L, D                     # natural layout is already lane-dense
    if N % 128 == 0:
        for c in (512, 384, 256, 128):  # unmasked full-lane stores
            if N % c == 0:
                return N // c, c
    # TODO(synk): lane-narrow fallback (last dim < 128 when D < 128 and L*D is
    # not a multiple of 128) forces masked vst.msk stores; padding the channel
    # dim would change semantics, so we fall back to the natural layout.
    return L, D


def _sublane_multiple(*dtypes):
    """Native packed-sublane multiple of the narrowest dtype in flight."""
    min_bytes = min(jnp.dtype(d).itemsize for d in dtypes)
    return max(8, 32 // max(1, min_bytes))


def _pick_row_tile(M, C, itemsize, target_bytes, sub_mult):
    """Rows per block: ~target_bytes per buffer, sublane-aligned (or full M)."""
    rows = max(1, target_bytes // (C * itemsize))
    if rows >= M:
        return M                        # full dim -> always a legal block shape
    rows = max(sub_mult, (rows // sub_mult) * sub_mult)
    return min(rows, M)


def _ensure_parallel_steps(M, B, tr, tb, sub_mult, min_steps=4):
    """Shrink (tb first, then tr) until the grid has enough steps to feed both
    TensorCores on v7x (and keep megacore busy on older chips)."""
    def steps(tr_, tb_):
        return pl.cdiv(M, tr_) * pl.cdiv(B, tb_)
    while steps(tr, tb) < min_steps:
        if tb > 1:
            tb = max(1, tb // 2)
        elif tr > sub_mult:
            tr = max(sub_mult, ((tr // 2) // sub_mult) * sub_mult)
        else:
            break
    return tr, tb


def add_pos_embed(x_flat, e_flat, out_dtype=None):
    """x_flat: (B, M, C); e_flat: (M, C) (kept in its own dtype, e.g. f32).

    Returns x_flat + e_flat[None].  By default the output dtype follows
    numpy-style promotion (matches PyTorch's `x + embed`); pass
    out_dtype=x_flat.dtype to keep bf16 activations bf16 and cut the output
    HBM traffic (intentional deviation from PyTorch promotion semantics).
    """
    B, M, C = x_flat.shape
    assert e_flat.shape == (M, C)
    if out_dtype is None:
        out_dtype = jnp.result_type(x_flat.dtype, e_flat.dtype)

    vmem_limit, target_bytes = _vmem_plan()
    sub_mult = _sublane_multiple(x_flat.dtype, e_flat.dtype, out_dtype)
    itemsize = max(jnp.dtype(x_flat.dtype).itemsize,
                   jnp.dtype(e_flat.dtype).itemsize,
                   jnp.dtype(out_dtype).itemsize)

    tr = _pick_row_tile(M, C, itemsize, target_bytes, sub_mult)
    # If the whole per-batch slab fits in one tile, fold several batches into a
    # single grid step to amortize the ~0.35 us/step overhead with bigger DMAs.
    if tr >= M:
        tb = max(1, min(B, target_bytes // max(1, M * C * itemsize)))
    else:
        tb = 1
    tr, tb = _ensure_parallel_steps(M, B, tr, tb, sub_mult)

    m_tiles = pl.cdiv(M, tr)
    b_tiles = pl.cdiv(B, tb)

    bytes_accessed = (
        B * M * C * jnp.dtype(x_flat.dtype).itemsize     # read x
        + M * C * jnp.dtype(e_flat.dtype).itemsize       # read embed (once)
        + B * M * C * jnp.dtype(out_dtype).itemsize)     # write out

    # NOTE: no input_output_aliases -- callers (incl. the demo) may still need
    # x afterwards, and the output dtype can differ from x's under promotion.
    return pl.pallas_call(
        _add_pos_kernel,
        out_shape=jax.ShapeDtypeStruct((B, M, C), out_dtype),
        grid_spec=pltpu.PrefetchScalarGridSpec(
            num_scalar_prefetch=0,
            # Batch innermost: the embedding tile's block index is constant
            # across b, so Pallas fetches each embed tile exactly once.
            grid=(m_tiles, b_tiles),
            in_specs=[
                pl.BlockSpec((tb, tr, C), lambda m, b: (b, m, 0)),
                pl.BlockSpec((tr, C), lambda m, b: (m, 0)),
            ],
            out_specs=pl.BlockSpec((tb, tr, C), lambda m, b: (b, m, 0)),
        ),
        compiler_params=pltpu.CompilerParams(
            dimension_semantics=("parallel", "parallel"),
            vmem_limit_bytes=int(vmem_limit)),
        cost_estimate=pl.CostEstimate(
            flops=B * M * C,
            transcendentals=0,
            bytes_accessed=int(bytes_accessed)),
    )(x_flat, e_flat)


class VitPosEmbed3d:
    """JAX/Pallas port of UNetVL VitPosEmbed3d."""

    def __init__(self, seqlens, dim, allow_interpolation=True, key=None,
                 out_dtype=None):
        assert len(seqlens) == 3
        self.seqlens = tuple(seqlens)
        self.dim = dim
        self.allow_interpolation = allow_interpolation
        self.out_dtype = out_dtype          # None -> numpy-style promotion
        if key is None:
            key = jax.random.PRNGKey(0)
        # nn.init.trunc_normal_(std=0.02, a=-2, b=2) truncates at *absolute*
        # +-2 (~ +-100 sigma for std=0.02), i.e. effectively an untruncated
        # N(0, 0.02^2).  Match that instead of truncating at +-2 sigma.
        self.embed = 0.02 * jax.random.truncated_normal(
            key, -2.0 / 0.02, 2.0 / 0.02,
            shape=(1, *self.seqlens, dim), dtype=jnp.float32)
        self._resize_cache = {}

    @property
    def _expected_x_ndim(self):
        return len(self.seqlens) + 2

    def _resized_embed(self, new_spatial):
        """Trilinear-resized embedding, cached per target spatial shape."""
        key = tuple(int(s) for s in new_spatial)
        cached = self._resize_cache.get(key)
        if cached is None:
            # antialias=False matches F.interpolate(mode='trilinear',
            # align_corners=False), which never antialiases (even when
            # downsampling).  Half-pixel centers match by default.
            cached = jax.image.resize(
                self.embed, (1, *key, self.dim), method="trilinear",
                antialias=False)
            self._resize_cache[key] = cached
        return cached

    def __call__(self, x):
        assert x.ndim == self._expected_x_ndim, \
            "Input tensor does not have expected number of dimensions"
        embed = self.embed
        if x.shape[1:] != embed.shape[1:]:
            assert self.allow_interpolation, \
                "Interpolation must be allowed to adjust positional embeddings"
            # The reference passes x.shape[2:-1], which trips
            # interpolate_sincos's ndim assert for 3d; the intended spatial
            # dims are x.shape[1:-1].
            embed = self._resized_embed(x.shape[1:-1])
        B = x.shape[0]
        S = x.shape[1:-1]
        D = x.shape[-1]
        L = int(S[0]) * int(S[1]) * int(S[2])
        M, C = _flatten_layout(L, D)
        x_flat = x.reshape(B, M, C)
        e_flat = embed.reshape(M, C)    # keep f32; promotion happens in-kernel
        out = add_pos_embed(x_flat, e_flat, out_dtype=self.out_dtype)
        return out.reshape(B, *S, D)


if __name__ == "__main__":
    key = jax.random.PRNGKey(0)
    k_embed, k_x, k_x2 = jax.random.split(key, 3)

    seqlens = (4, 4, 4)
    dim = 32
    B = 2

    module = VitPosEmbed3d(seqlens, dim, allow_interpolation=True, key=k_embed)

    # --- path 1: spatial shape matches the stored embedding ----------------
    x = jax.random.normal(k_x, (B, *seqlens, dim), dtype=jnp.float32)
    out = jax.block_until_ready(module(x))
    ref = x + module.embed              # broadcast over batch
    assert out.shape == x.shape and out.dtype == ref.dtype
    assert jnp.allclose(out, ref, atol=1e-6, rtol=1e-6)

    # --- path 2: mismatched spatial shape -> trilinear-resized embedding ---
    x2 = jax.random.normal(k_x2, (B, 8, 8, 8, dim), dtype=jnp.float32)
    out2 = jax.block_until_ready(module(x2))
    embed2 = jax.image.resize(module.embed, (1, 8, 8, 8, dim),
                              method="trilinear", antialias=False)
    ref2 = x2 + embed2
    assert out2.shape == x2.shape
    assert jnp.allclose(out2, ref2, atol=1e-6, rtol=1e-6)

    print("KERNEL_OK")
</pallas_src>

<mosaic_0001>
module attributes {stable_mosaic.version = 11 : i64} {
  func.func @_add_pos_kernel(%arg0: i32, %arg1: i32, %arg2: memref<1x4x512xf32, #tpu.memory_space<vmem>>, %arg3: memref<4x512xf32, #tpu.memory_space<vmem>>, %arg4: memref<1x4x512xf32, #tpu.memory_space<vmem>>) attributes {dimension_semantics = [#tpu.dimension_semantics<parallel>, #tpu.dimension_semantics<parallel>], iteration_bounds = array<i64: 1, 2>, scalar_prefetch = 0 : i64, scratch_operands = 0 : i64, tpu.core_type = #tpu.core_type<tc>, window_params = [{transform_indices = @transform_0, window_bounds = array<i64: 1, 4, 512>}, {transform_indices = @transform_1, window_bounds = array<i64: 4, 512>}, {transform_indices = @transform_2, window_bounds = array<i64: 1, 4, 512>}]} {
    %c0 = arith.constant 0 : index
    %c0_0 = arith.constant 0 : index
    %c0_1 = arith.constant 0 : index
    %0 = vector.load %arg2[%c0, %c0_0, %c0_1] : memref<1x4x512xf32, #tpu.memory_space<vmem>>, vector<1x4x512xf32>
    %c0_2 = arith.constant 0 : index
    %c0_3 = arith.constant 0 : index
    %1 = vector.load %arg3[%c0_2, %c0_3] : memref<4x512xf32, #tpu.memory_space<vmem>>, vector<4x512xf32>
    %2 = vector.shape_cast %1 : vector<4x512xf32> to vector<1x4x512xf32>
    %3 = arith.addf %0, %2 : vector<1x4x512xf32>
    %c0_4 = arith.constant 0 : index
    %c0_5 = arith.constant 0 : index
    %c0_6 = arith.constant 0 : index
    %4 = vector.load %arg4[%c0_4, %c0_5, %c0_6] : memref<1x4x512xf32, #tpu.memory_space<vmem>>, vector<1x4x512xf32>
    tpu.vector_store %arg4[%c0_4, %c0_5, %c0_6], %3 {strides = array<i32>} : memref<1x4x512xf32, #tpu.memory_space<vmem>>, vector<1x4x512xf32>,
    return
  }
  func.func @transform_0(%arg0: i32, %arg1: i32) -> (i32, i32, i32) {
    %c0_i32 = arith.constant 0 : i32
    %c0_i32_0 = arith.constant 0 : i32
    return %arg1, %arg0, %c0_i32 : i32, i32, i32
  }
  func.func @transform_1(%arg0: i32, %arg1: i32) -> (i32, i32) {
    %c0_i32 = arith.constant 0 : i32
    %c0_i32_0 = arith.constant 0 : i32
    return %arg0, %c0_i32 : i32, i32
  }
  func.func @transform_2(%arg0: i32, %arg1: i32) -> (i32, i32, i32) {
    %c0_i32 = arith.constant 0 : i32
    %c0_i32_0 = arith.constant 0 : i32
    return %arg1, %arg0, %c0_i32 : i32, i32, i32
  }
}

</mosaic_0001>

<llo_original>
// kernel: tpu_custom_call.1
$region0: #{tpu_custom_call.1}
  #allocation0 [shape = 'u32[]', space=smem, size = 0x4, offset = 0x4, fixed_abs, tag = 'smem constant byte address 0x4 - core index']
  #allocation1 [shape = 'u32[72,128]{1,0:T(1,128)}', space=vmem, size = 0x9000, scoped, tag = 'internal scratch']
  %s0 = inlined_call_operand.hbm [shape: f32[2,4,512], index: 0, kind: input, shape index: {}]
  %s1 = inlined_call_operand.hbm [shape: f32[4,512], index: 1, kind: input, shape index: {}]
  %s2 = inlined_call_operand.hbm [shape: f32[2,4,512], index: 2, kind: output, shape index: {}]
  %s3 = sld [smem:[#allocation0]]
  $region49: #{tpu_custom_call.1} parent=0
    _
  %s5 = ssub.s32 1, %s3
  %s6 = scalar_select 0, %s5, %s3
  $region1: #{tpu_custom_call.1} parent=0
    #allocation2 [shape = 'u8[16384]{0}', space=vmem, size = 0x4000, scoped, tag = 'input window, operand 0']
    #allocation3 [shape = 's32[2]{0}', space=sflag, size = 0x8, scoped, tag = 'scoped memory for tpu_custom_call.1']
    #allocation4 [shape = 's32[2]{0}', space=sflag, size = 0x8, scoped, tag = 'scoped memory for tpu_custom_call.1']
    #allocation5 [shape = 'u8[8192]{0}', space=vmem, size = 0x2000, scoped, tag = 'input window, operand 1, single buffered']
    #allocation6 [shape = 's32[1]{0}', space=sflag, size = 0x4, scoped, tag = 'scoped memory for tpu_custom_call.1']
    #allocation7 [shape = 'u8[16384]{0}', space=vmem, size = 0x4000, scoped, tag = 'output window, operand 0']
    %7 = vsyncpa [#allocation3], 0
    %s8 = scalar_lea.sflag [#allocation3], 1
    %9 = vsyncpa %s8, 0
    %10 = vsyncpa [#allocation6], 0
    %11 = vsyncpa [#allocation4], 0
    %s12 = scalar_lea.sflag [#allocation4], 1
    %13 = vsyncpa %s12, 0
    loop: start=0, step=1, limit=4
    $region2: #{tpu_custom_call.1} parent=1 // loop_pre_header
      _
    $region3: #{tpu_custom_call.1} parent=1 // loop_header
      %s15 = sphi 0, %s19
      %p16 = scmp.ge.s32.totalorder %s15, 4
      %s22 = sphi 0, %s34
      %s23 = sphi 0, %s30
      %s24 = sphi 0, %s22
      %s25 = sphi 0, %s23
      %s26 = sphi 0, %s24
      %s27 = sphi 0, %s25
      %s39 = sphi 0, %s41
      %s42 = sphi 0, %s39
      %s43 = sphi 0, %s42
      %s59 = sphi 0, %s43
      %s65 = sphi 0, %s67
      %s68 = sphi 0, %s65
      %s69 = sphi 0, %s68
      %s85 = sphi 0, %s69
      %s93 = sphi 0, %s95
      %s96 = sphi 0, %s93
      %s97 = sphi 0, %s96
      %s113 = sphi 0, %s97
    $region4: #{tpu_custom_call.1} parent=1 // loop_header_branch
      %18 = sbr.rel (%p16) target = $region8
    $region5: #{tpu_custom_call.1} parent=1 // loop_body
      %s20 = ssub.s32 %s15, 1
      %s21 = ssub.s32 %s15, 2
      %s28 = sadd.s32 1, %s23
      %p29 = scmp.ge.s32.totalorder %s28, 2
      %s30 = scalar_select %p29, 0, %s28
      %s31 = sadd.s32 1, %s22
      %s32 = scalar_select %p29, %s31, %s22
      %p33 = scmp.ge.s32.totalorder %s32, 1
      %s34 = scalar_select %p33, 0, %s32
      %s35 = ssub.s32 %s23, %s30
      %s36 = ssub.s32 %s22, %s34
      %s37 = sor.u32 %s35, %s36
      %p38 = scmp.eq.s32.totalorder %s37, 0
      %s40 = sadd.s32 %s39, 1
      %s41 = scalar_select %p38, %s39, %s40
      %p44 = pneg %p38
      %p45 = scmp.eq.s32.totalorder %s15, 1
      %p46 = por %p44, %p45
      %p47 = scmp.ne.s32.totalorder %s39, %s42
      %p48 = scmp.eq.s32.totalorder %s15, 0
      %p49 = por %p47, %p48
      %p50 = scmp.ne.s32.totalorder %s39, %s42
      %p51 = scmp.eq.s32.totalorder %s20, 1
      %p52 = por %p50, %p51
      %p53 = scmp.ne.s32.totalorder %s42, %s43
      %p54 = scmp.eq.s32.totalorder %s20, 0
      %p55 = por %p53, %p54
      %p56 = scmp.ne.s32.totalorder %s42, %s43
      %p57 = scmp.eq.s32.totalorder %s21, 1
      %p58 = por %p56, %p57
      %p60 = scmp.ne.s32.totalorder %s43, %s59
      %p61 = scmp.eq.s32.totalorder %s21, 0
      %p62 = por %p60, %p61
      %s63 = ssub.s32 %s22, %s34
      %p64 = scmp.eq.s32.totalorder %s63, 0
      %s66 = sadd.s32 %s65, 1
      %s67 = scalar_select %p64, %s65, %s66
      %p70 = pneg %p64
      %p71 = scmp.eq.s32.totalorder %s15, 1
      %p72 = por %p70, %p71
      %p73 = scmp.ne.s32.totalorder %s65, %s68
      %p74 = scmp.eq.s32.totalorder %s15, 0
      %p75 = por %p73, %p74
      %p76 = scmp.ne.s32.totalorder %s65, %s68
      %p77 = scmp.eq.s32.totalorder %s20, 1
      %p78 = por %p76, %p77
      %p79 = scmp.ne.s32.totalorder %s68, %s69
      %p80 = scmp.eq.s32.totalorder %s20, 0
      %p81 = por %p79, %p80
      %p82 = scmp.ne.s32.totalorder %s68, %s69
      %p83 = scmp.eq.s32.totalorder %s21, 1
      %p84 = por %p82, %p83
      %p86 = scmp.ne.s32.totalorder %s69, %s85
      %p87 = scmp.eq.s32.totalorder %s21, 0
      %p88 = por %p86, %p87
      %s89 = ssub.s32 %s23, %s30
      %s90 = ssub.s32 %s22, %s34
      %s91 = sor.u32 %s89, %s90
      %p92 = scmp.eq.s32.totalorder %s91, 0
      %s94 = sadd.s32 %s93, 1
      %s95 = scalar_select %p92, %s93, %s94
      %p98 = pneg %p92
      %p99 = scmp.eq.s32.totalorder %s15, 1
      %p100 = por %p98, %p99
      %p101 = scmp.ne.s32.totalorder %s93, %s96
      %p102 = scmp.eq.s32.totalorder %s15, 0
      %p103 = por %p101, %p102
      %p104 = scmp.ne.s32.totalorder %s93, %s96
      %p105 = scmp.eq.s32.totalorder %s20, 1
      %p106 = por %p104, %p105
      %p107 = scmp.ne.s32.totalorder %s96, %s97
      %p108 = scmp.eq.s32.totalorder %s20, 0
      %p109 = por %p107, %p108
      %p110 = scmp.ne.s32.totalorder %s96, %s97
      %p111 = scmp.eq.s32.totalorder %s21, 1
      %p112 = por %p110, %p111
      %p114 = scmp.ne.s32.totalorder %s97, %s113
      %p115 = scmp.eq.s32.totalorder %s21, 0
      %p116 = por %p114, %p115
      %p117 = scmp.le.s32.totalorder 1, %s15
      %p118 = scmp.lt.s32.totalorder %s15, 3
      %p119 = pnand %p117, %p118
      %p120 = pneg %p119
      // Predicated region
      $region9: #{tpu_custom_call.1} parent=5 // pred_check
        _
      $region10: #{tpu_custom_call.1} parent=5 // pred_check_branch
        %122 = sbr.rel (%p119) target = $region12
      $region11: #{tpu_custom_call.1} parent=5 // pred_region
        %s123 = ssub.s32 %s15, 1
        // Predicated region
        $region13: #{tpu_custom_call.1} parent=11 // pred_check
          %p124 = pneg %p81
        $region14: #{tpu_custom_call.1} parent=11 // pred_check_branch
          %126 = sbr.rel (%p124) target = $region16
        $region15: #{tpu_custom_call.1} parent=11 // pred_region
          %128 = vsyncadd [#allocation6], 0
          %s129 = smul.addr %s24, 4
          %s130 = smul.addr %s129, 4
          %s131 = scalar_lea.hbm %s1, %s130
          %s133 = sshll.u32 %s131, 4
          %s134 = int_to_ptr.hbm [resolvable:$true] %s133
          %s135 = sshll.u32 [#allocation5], 4
          %s136 = int_to_ptr.vmem [resolvable:$true] %s135
          %138 = dma.hbm_to_vmem [thread:$0]  %s134, 256, %s136, [#allocation6]
        $region16: #{tpu_custom_call.1} parent=11 // pred_fallthru
          _
      $region12: #{tpu_custom_call.1} parent=5 // pred_fallthru
        _
      %p139 = scmp.lt.s32.totalorder %s15, 2
      // Predicated region
      $region17: #{tpu_custom_call.1} parent=5 // pred_check
        %p140 = pneg %p139
      $region18: #{tpu_custom_call.1} parent=5 // pred_check_branch
        %142 = sbr.rel (%p140) target = $region20
      $region19: #{tpu_custom_call.1} parent=5 // pred_region
        // Predicated region
        $region21: #{tpu_custom_call.1} parent=19 // pred_check
          %p143 = pneg %p49
        $region22: #{tpu_custom_call.1} parent=19 // pred_check_branch
          %145 = sbr.rel (%p143) target = $region24
        $region23: #{tpu_custom_call.1} parent=19 // pred_region
          %s146 = sand.u32 %s39, 1
          %s147 = scalar_lea.sflag [#allocation3], %s146
          %s148 = sand.u32 %s39, 1
          %s149 = smul.addr %s148, 16
          %s150 = scalar_lea.vmem [#allocation2], %s149
          %152 = vsyncadd %s147, 0
          %s153 = smul.addr %s22, 4
          %s154 = smul.addr %s23, 4
          %s155 = sadd.s32 %s153, %s154
          %s156 = smul.addr %s155, 4
          %s157 = scalar_lea.hbm %s0, %s156
          %s159 = sshll.u32 %s157, 4
          %s160 = int_to_ptr.hbm [resolvable:$true] %s159
          %s161 = sshll.u32 %s150, 4
          %s162 = int_to_ptr.vmem [resolvable:$true] %s161
          %164 = dma.hbm_to_vmem [thread:$0]  %s160, 256, %s162, %s147
        $region24: #{tpu_custom_call.1} parent=19 // pred_fallthru
          _
      $region20: #{tpu_custom_call.1} parent=5 // pred_fallthru
        _
      %p165 = scmp.le.s32.totalorder 1, %s15
      %p166 = scmp.lt.s32.totalorder %s15, 3
      %p167 = pnand %p165, %p166
      %p168 = pneg %p167
      // Predicated region
      $region25: #{tpu_custom_call.1} parent=5 // pred_check
        _
      $region26: #{tpu_custom_call.1} parent=5 // pred_check_branch
        %170 = sbr.rel (%p167) target = $region28
      $region27: #{tpu_custom_call.1} parent=5 // pred_region
        %s171 = ssub.s32 %s15, 1
        %s172 = sand.u32 %s42, 1
        %s173 = scalar_lea.sflag [#allocation3], %s172
        %s174 = sand.u32 %s42, 1
        %s175 = smul.addr %s174, 16
        %s176 = scalar_lea.vmem [#allocation2], %s175
        // Predicated region
        $region29: #{tpu_custom_call.1} parent=27 // pred_check
          %p177 = pneg %p55
        $region30: #{tpu_custom_call.1} parent=27 // pred_check_branch
          %179 = sbr.rel (%p177) target = $region32
        $region31: #{tpu_custom_call.1} parent=27 // pred_region
          %181 = dma.done %s173, 256
        $region32: #{tpu_custom_call.1} parent=27 // pred_fallthru
          _
        // Predicated region
        $region33: #{tpu_custom_call.1} parent=27 // pred_check
          %p182 = pneg %p81
        $region34: #{tpu_custom_call.1} parent=27 // pred_check_branch
          %184 = sbr.rel (%p182) target = $region36
        $region35: #{tpu_custom_call.1} parent=27 // pred_region
          %186 = dma.done [#allocation6], 256
        $region36: #{tpu_custom_call.1} parent=27 // pred_fallthru
          _
        %s187 = sand.u32 %s42, 1
        %s188 = scalar_lea.sflag [#allocation3], %s187
        %s189 = sand.u32 %s42, 1
        %s190 = smul.addr %s189, 16
        %s191 = scalar_lea.vmem [#allocation2], %s190
        %p192 = pneg %p55
        %p193 = pneg %p52
        %p194 = pneg %p81
        %p195 = pneg %p78
        %p196 = pneg %p109
        %p197 = pneg %p106
        %s198 = sand.u32 %s96, 1
        %s199 = scalar_lea.sflag [#allocation4], %s198
        %s200 = sand.u32 %s96, 1
        %s201 = smul.addr %s200, 16
        %s202 = scalar_lea.vmem [#allocation7], %s201
        %v203 = vld [vmem:[%s176] sm:$0xff]
        %v204 = vld [vmem:[%s176 + $0x8] sm:$0xff]
        %v205 = vld [vmem:[#allocation5] sm:$0xff]
        %v206 = vld [vmem:[#allocation5 + $0x8] sm:$0xff]
        %v207 = vadd.f32 %v203, %v205
        %v208 = vadd.f32 %v204, %v206
        %209 = vst [vmem:[%s202] sm:$0xff] %v207
        %210 = vst [vmem:[%s202 + $0x8] sm:$0xff] %v208
        %s211 = sand.u32 %s96, 1
        %s212 = scalar_lea.sflag [#allocation4], %s211
        %s213 = sand.u32 %s96, 1
        %s214 = smul.addr %s213, 16
        %s215 = scalar_lea.vmem [#allocation7], %s214
        // Predicated region
        $region37: #{tpu_custom_call.1} parent=27 // pred_check
          %p216 = pneg %p106
        $region38: #{tpu_custom_call.1} parent=27 // pred_check_branch
          %218 = sbr.rel (%p216) target = $region40
        $region39: #{tpu_custom_call.1} parent=27 // pred_region
          %220 = vsyncadd %s212, 0
          %s221 = smul.addr %s24, 4
          %s222 = smul.addr %s25, 4
          %s223 = sadd.s32 %s221, %s222
          %s224 = smul.addr %s223, 4
          %s225 = scalar_lea.hbm %s2, %s224
          %s227 = sshll.u32 %s215, 4
          %s228 = int_to_ptr.vmem [resolvable:$true] %s227
          %s229 = sshll.u32 %s225, 4
          %s230 = int_to_ptr.hbm [resolvable:$true] %s229
          %232 = dma.vmem_to_hbm [thread:$0]  %s228, 256, %s230, %s212
        $region40: #{tpu_custom_call.1} parent=27 // pred_fallthru
          _
      $region28: #{tpu_custom_call.1} parent=5 // pred_fallthru
        _
      %p233 = scmp.le.s32.totalorder 2, %s15
      // Predicated region
      $region41: #{tpu_custom_call.1} parent=5 // pred_check
        %p234 = pneg %p233
      $region42: #{tpu_custom_call.1} parent=5 // pred_check_branch
        %236 = sbr.rel (%p234) target = $region44
      $region43: #{tpu_custom_call.1} parent=5 // pred_region
        %s237 = ssub.s32 %s15, 2
        // Predicated region
        $region45: #{tpu_custom_call.1} parent=43 // pred_check
          %p238 = pneg %p112
        $region46: #{tpu_custom_call.1} parent=43 // pred_check_branch
          %240 = sbr.rel (%p238) target = $region48
        $region47: #{tpu_custom_call.1} parent=43 // pred_region
          %s241 = sand.u32 %s97, 1
          %s242 = scalar_lea.sflag [#allocation4], %s241
          %s243 = sand.u32 %s97, 1
          %s244 = smul.addr %s243, 16
          %s245 = scalar_lea.vmem [#allocation7], %s244
          %247 = dma.done %s242, 256
        $region48: #{tpu_custom_call.1} parent=43 // pred_fallthru
          _
      $region44: #{tpu_custom_call.1} parent=5 // pred_fallthru
        _
    $region6: #{tpu_custom_call.1} parent=1 // loop_footer
      %s19 = sadd.s32 1, %s15
    $region7: #{tpu_custom_call.1} parent=1 // loop_footer_branch
      %14 = sbr.rel target = $region3
    $region8: #{tpu_custom_call.1} parent=1 // loop_exit
      _
    %248 = vsyncpa [#allocation3], 1
    %s249 = scalar_lea.sflag [#allocation3], 1
    %250 = vsyncpa %s249, 1
    %251 = vsyncpa [#allocation6], 1
    %252 = vsyncpa [#allocation4], 1
    %s253 = scalar_lea.sflag [#allocation4], 1
    %254 = vsyncpa %s253, 1

</llo_original>
